<compile_context>
chip_gen: v7x
topology: tpu7x:2x2x1
jax: 0.10.0
libtpu: 0.0.40
codegen_flags: <defaults>
</compile_context>

<pallas_src>
import functools

import jax
import jax.numpy as jnp
import numpy as np
from jax.experimental import pallas as pl
from jax.experimental.pallas import tpu as pltpu


def _smooth_l1(diff, beta):
    # beta is a Python float -> (0.5 / beta) and (0.5 * beta) are compile-time
    # constants; no per-element divide survives.
    ad = jnp.abs(diff)
    return jnp.where(ad < beta, (0.5 / beta) * ad * ad, ad - 0.5 * beta)


def _line_loss_kernel(pred_ref, target_ref, out_ref, *,
                      beta, scale, n_total, tile_n, ragged,
                      with_center_loss, center_loss_weight):
    i = pl.program_id(0)
    last = pl.num_programs(0) - 1

    @pl.when(i == 0)
    def _init():
        out_ref[...] = jnp.zeros_like(out_ref)

    # In-kernel upcast: inputs stay in their native dtype in HBM/VMEM.
    pred = pred_ref[...].astype(jnp.float32)     # (6, T)
    tgt = target_ref[...].astype(jnp.float32)    # (6, T)

    # Swapped target rows: [t4, t5, t2, t3, t0, t1] (endpoints exchanged,
    # center kept) — built once per tile with a sublane concat.
    tgt_sw = jnp.concatenate([tgt[4:6, :], tgt[2:4, :], tgt[0:2, :]], axis=0)

    # Two full-block smooth-L1 evaluations (6/8 sublane occupancy).
    sl_d = _smooth_l1(pred - tgt, beta)          # (6, T)
    sl_s = _smooth_l1(pred - tgt_sw, beta)       # (6, T)

    cost = jnp.sum(sl_d, axis=0, keepdims=True)      # (1, T) sublane reduce
    cost_sw = jnp.sum(sl_s, axis=0, keepdims=True)   # (1, T)
    cl = jnp.minimum(cost, cost_sw)

    if with_center_loss:
        center = jnp.sum(sl_d[2:4, :], axis=0, keepdims=True)
        cl = cl + center * center_loss_weight
    # NOTE: the 1/(1 + center_loss_weight) factor is folded into `scale`.

    if ragged:
        # Mask only matters (and only runs) on the last grid step.
        @pl.when(i != last)
        def _acc_full():
            out_ref[...] = out_ref[...] + scale * jnp.sum(cl)

        @pl.when(i == last)
        def _acc_masked():
            col = jax.lax.broadcasted_iota(jnp.int32, (1, tile_n), 1)
            valid = col < (n_total - i * tile_n)
            out_ref[...] = out_ref[...] + scale * jnp.sum(
                jnp.where(valid, cl, 0.0))
    else:
        out_ref[...] = out_ref[...] + scale * jnp.sum(cl)


def _round_up(x, m):
    return ((x + m - 1) // m) * m


def line_loss_transposed(pred_t, target_t, *, beta=1.0, loss_weight=1.0,
                         reduction='mean', with_center_loss=False,
                         center_loss_weight=0.0, tile_n=None):
    """LineLoss on channels-first (6, N) pred/target (transpose-free path)."""
    assert pred_t.shape == target_t.shape
    d, n = pred_t.shape
    assert d == 6, "LineLoss requires feature dim == 6"
    assert n > 0, "empty input not supported (PyTorch mean would be NaN)"
    assert reduction in ('mean', 'sum')
    # TODO(synk): reduction='none', per-row `weight` and `avg_factor` are not
    # wired into the kernel; defaults ('mean'/'sum', no weight) only.

    itemsize = pred_t.dtype.itemsize
    if tile_n is None:
        # VMEM-safe everywhere (v5e 16 MiB scoped default included):
        # 2 inputs x 2 pipeline buffers x 8 padded sublanes x tn x itemsize.
        tile_n = 131072 if itemsize <= 2 else 65536
    tn = min(int(tile_n), _round_up(n, 128))
    tn = _round_up(tn, 128)
    grid = pl.cdiv(n, tn)
    ragged = (n % tn) != 0

    # Fold loss_weight, the mean's 1/N and 1/(1+clw) into one scalar.
    scale = float(loss_weight) / (1.0 + float(center_loss_weight))
    if reduction == 'mean':
        scale /= float(n)

    kernel = functools.partial(
        _line_loss_kernel,
        beta=float(beta),
        scale=scale,
        n_total=int(n),
        tile_n=int(tn),
        ragged=bool(ragged),
        with_center_loss=bool(with_center_loss),
        center_loss_weight=float(center_loss_weight),
    )

    # (6, tn) blocks pad to 8 sublanes in VMEM; 2 inputs x 2 pipeline buffers.
    buf_bytes = 2 * 2 * 8 * tn * itemsize
    vmem_limit = None
    if buf_bytes > (14 << 20):
        vmem_limit = int(min(buf_bytes + (4 << 20), 56 << 20))

    # TODO(synk): optional 2-TensorCore split (leading "parallel" grid axis +
    # (2,1) partial outputs) for very large N on v7x is not implemented.
    out = pl.pallas_call(
        kernel,
        out_shape=jax.ShapeDtypeStruct((1, 1), jnp.float32),
        grid=(grid,),
        in_specs=[pl.BlockSpec((6, tn), lambda i: (0, i)),
                  pl.BlockSpec((6, tn), lambda i: (0, i))],
        out_specs=pl.BlockSpec((1, 1), lambda i: (0, 0)),
        compiler_params=pltpu.CompilerParams(
            dimension_semantics=("arbitrary",),   # grid axis carries reduction
            allow_input_fusion=[True, True],      # let XLA fuse input transposes
            vmem_limit_bytes=vmem_limit,
        ),
    )(pred_t, target_t)
    return out[0, 0]


def line_loss(pred, target, **kwargs):
    """LineLoss.forward for the module's row-major (N, 6) pred/target.

    The transpose to (6, N) is left to XLA; with the whole computation under
    jit, allow_input_fusion lets it fuse into the Pallas call's operands.
    Callers that can produce (6, N) directly should use line_loss_transposed.
    """
    assert pred.shape == target.shape
    assert pred.ndim == 2 and pred.shape[-1] == 6
    return line_loss_transposed(pred.T, target.T, **kwargs)


def _line_loss_ref(pred, target, *, beta=1.0, loss_weight=1.0, reduction='mean',
                   with_center_loss=False, center_loss_weight=0.0):
    """Pure-JAX reference mirroring the PyTorch forward (f32 math)."""
    pred = pred.astype(jnp.float32)
    target = target.astype(jnp.float32)

    def sl1(d):
        ad = jnp.abs(d)
        return jnp.where(ad < beta, 0.5 * ad * ad / beta, ad - 0.5 * beta)

    cost = sl1(pred - target).sum(-1)
    tgt_sw = jnp.concatenate(
        [target[..., 4:6], target[..., 2:4], target[..., 0:2]], axis=-1)
    cost_ = sl1(pred - tgt_sw).sum(-1)
    cost_line = jnp.minimum(cost, cost_)
    if with_center_loss:
        cost_center = sl1(pred[..., 2:4] - target[..., 2:4]).sum(-1)
    else:
        cost_center = 0.0
    cost_line = (cost_line + cost_center * center_loss_weight) / (1.0 + center_loss_weight)
    red = jnp.mean(cost_line) if reduction == 'mean' else jnp.sum(cost_line)
    return loss_weight * red


if __name__ == "__main__":
    key = jax.random.PRNGKey(0)
    k1, k2 = jax.random.split(key)

    # Case 1: N=200, default tile, jitted end-to-end (single ragged block;
    # exercises the in-kernel lane mask and the fusable transpose path).
    N = 200
    pred = jax.random.normal(k1, (N, 6), dtype=jnp.float32)
    target = jax.random.normal(k2, (N, 6), dtype=jnp.float32)

    loss = jax.block_until_ready(jax.jit(line_loss)(pred, target))
    ref = _line_loss_ref(pred, target)
    np.testing.assert_allclose(np.asarray(loss), np.asarray(ref),
                               rtol=1e-5, atol=1e-5)

    # Case 2: N=300 with a tiny tile -> 3 grid steps (carried output
    # accumulator + ragged last block, mask applied on last step only).
    N2 = 300
    k3, k4 = jax.random.split(k2)
    pred2 = jax.random.normal(k3, (N2, 6), dtype=jnp.float32)
    target2 = jax.random.normal(k4, (N2, 6), dtype=jnp.float32)
    loss2 = jax.block_until_ready(line_loss(pred2, target2, tile_n=128))
    ref2 = _line_loss_ref(pred2, target2)
    np.testing.assert_allclose(np.asarray(loss2), np.asarray(ref2),
                               rtol=1e-5, atol=1e-5)

    # Case 3: center loss enabled + 'sum' reduction + loss_weight.
    loss3 = jax.block_until_ready(
        line_loss(pred, target, with_center_loss=True, center_loss_weight=0.5,
                  reduction='sum', loss_weight=2.0))
    ref3 = _line_loss_ref(pred, target, with_center_loss=True,
                          center_loss_weight=0.5, reduction='sum',
                          loss_weight=2.0)
    np.testing.assert_allclose(np.asarray(loss3), np.asarray(ref3),
                               rtol=1e-5, atol=1e-5)

    # Case 4: center loss + 'mean' (locks in the folded 1/(1+clw) scaling).
    loss4 = jax.block_until_ready(
        line_loss(pred2, target2, with_center_loss=True,
                  center_loss_weight=0.25, reduction='mean'))
    ref4 = _line_loss_ref(pred2, target2, with_center_loss=True,
                          center_loss_weight=0.25, reduction='mean')
    np.testing.assert_allclose(np.asarray(loss4), np.asarray(ref4),
                               rtol=1e-5, atol=1e-5)

    # Case 5: bf16 inputs (in-kernel upcast path; reference uses f32 math on
    # the same bf16-rounded values).
    pred_bf = pred.astype(jnp.bfloat16)
    target_bf = target.astype(jnp.bfloat16)
    loss5 = jax.block_until_ready(line_loss(pred_bf, target_bf))
    ref5 = _line_loss_ref(pred_bf, target_bf)
    np.testing.assert_allclose(np.asarray(loss5), np.asarray(ref5),
                               rtol=1e-4, atol=1e-5)

    print("KERNEL_OK")
</pallas_src>

<mosaic_0001>
module attributes {stable_mosaic.version = 11 : i64} {
  func.func @_line_loss_kernel(%arg0: i32, %arg1: memref<6x256xf32, #tpu.memory_space<vmem>>, %arg2: memref<6x256xf32, #tpu.memory_space<vmem>>, %arg3: memref<1x1xf32, #tpu.memory_space<vmem>>) attributes {dimension_semantics = [#tpu.dimension_semantics<arbitrary>], iteration_bounds = array<i64: 1>, scalar_prefetch = 0 : i64, scratch_operands = 0 : i64, tpu.core_type = #tpu.core_type<tc>, window_params = [{transform_indices = @transform_0, window_bounds = array<i64: 6, 256>}, {transform_indices = @transform_1, window_bounds = array<i64: 6, 256>}, {pipeline_mode = #tpu.pipeline_mode<synchronous>, transform_indices = @transform_2, window_bounds = array<i64: 1, 1>}]} {
    %c0_i32 = arith.constant 0 : i32
    %0 = arith.cmpi eq, %arg0, %c0_i32 : i32
    %1 = arith.extui %0 : i1 to i32
    %c0_i32_0 = arith.constant 0 : i32
    %2 = arith.cmpi ne, %1, %c0_i32_0 : i32
    scf.if %2 {
      %cst_15 = arith.constant 0.000000e+00 : f32
      %40 = vector.broadcast %cst_15 : f32 to vector<1x1xf32>
      %c0_16 = arith.constant 0 : index
      %c0_17 = arith.constant 0 : index
      %41 = vector.load %arg3[%c0_16, %c0_17] : memref<1x1xf32, #tpu.memory_space<vmem>>, vector<1x1xf32>
      tpu.vector_store %arg3[%c0_16, %c0_17], %40 {strides = array<i32>} : memref<1x1xf32, #tpu.memory_space<vmem>>, vector<1x1xf32>,
    } else {
    }
    %c0 = arith.constant 0 : index
    %c0_1 = arith.constant 0 : index
    %3 = vector.load %arg1[%c0, %c0_1] : memref<6x256xf32, #tpu.memory_space<vmem>>, vector<6x256xf32>
    %c0_2 = arith.constant 0 : index
    %c0_3 = arith.constant 0 : index
    %4 = vector.load %arg2[%c0_2, %c0_3] : memref<6x256xf32, #tpu.memory_space<vmem>>, vector<6x256xf32>
    %5 = vector.extract_strided_slice %4 {offsets = [4, 0], sizes = [2, 256], strides = [1, 1]} : vector<6x256xf32> to vector<2x256xf32>
    %6 = vector.extract_strided_slice %4 {offsets = [2, 0], sizes = [2, 256], strides = [1, 1]} : vector<6x256xf32> to vector<2x256xf32>
    %7 = vector.extract_strided_slice %4 {offsets = [0, 0], sizes = [2, 256], strides = [1, 1]} : vector<6x256xf32> to vector<2x256xf32>
    %8 = tpu.concatenate %5, %6, %7 in 0 : vector<2x256xf32>, vector<2x256xf32>, vector<2x256xf32> -> vector<6x256xf32>
    %9 = arith.subf %3, %4 : vector<6x256xf32>
    %10 = math.absf %9 : vector<6x256xf32>
    %cst = arith.constant 1.000000e+00 : f32
    %11 = vector.broadcast %cst : f32 to vector<6x256xf32>
    %12 = arith.cmpf olt, %10, %11 : vector<6x256xf32>
    %cst_4 = arith.constant 5.000000e-01 : f32
    %13 = vector.broadcast %cst_4 : f32 to vector<6x256xf32>
    %14 = arith.mulf %13, %10 : vector<6x256xf32>
    %15 = arith.mulf %14, %10 : vector<6x256xf32>
    %cst_5 = arith.constant 5.000000e-01 : f32
    %16 = vector.broadcast %cst_5 : f32 to vector<6x256xf32>
    %17 = arith.subf %10, %16 : vector<6x256xf32>
    %18 = arith.select %12, %15, %17 : vector<6x256xi1>, vector<6x256xf32>
    %19 = arith.subf %3, %8 : vector<6x256xf32>
    %20 = math.absf %19 : vector<6x256xf32>
    %cst_6 = arith.constant 1.000000e+00 : f32
    %21 = vector.broadcast %cst_6 : f32 to vector<6x256xf32>
    %22 = arith.cmpf olt, %20, %21 : vector<6x256xf32>
    %cst_7 = arith.constant 5.000000e-01 : f32
    %23 = vector.broadcast %cst_7 : f32 to vector<6x256xf32>
    %24 = arith.mulf %23, %20 : vector<6x256xf32>
    %25 = arith.mulf %24, %20 : vector<6x256xf32>
    %cst_8 = arith.constant 5.000000e-01 : f32
    %26 = vector.broadcast %cst_8 : f32 to vector<6x256xf32>
    %27 = arith.subf %20, %26 : vector<6x256xf32>
    %28 = arith.select %22, %25, %27 : vector<6x256xi1>, vector<6x256xf32>
    %cst_9 = arith.constant dense<0.000000e+00> : vector<256xf32>
    %29 = vector.multi_reduction <add>, %18, %cst_9 [0] : vector<6x256xf32> to vector<256xf32>
    %30 = vector.shape_cast %29 : vector<256xf32> to vector<1x256xf32>
    %cst_10 = arith.constant dense<0.000000e+00> : vector<256xf32>
    %31 = vector.multi_reduction <add>, %28, %cst_10 [0] : vector<6x256xf32> to vector<256xf32>
    %32 = vector.shape_cast %31 : vector<256xf32> to vector<1x256xf32>
    %33 = arith.minimumf %30, %32 : vector<1x256xf32>
    %c0_i32_11 = arith.constant 0 : i32
    %34 = arith.cmpi ne, %arg0, %c0_i32_11 : i32
    %35 = arith.extui %34 : i1 to i32
    %c0_i32_12 = arith.constant 0 : i32
    %36 = arith.cmpi ne, %35, %c0_i32_12 : i32
    scf.if %36 {
      %c0_15 = arith.constant 0 : index
      %c0_16 = arith.constant 0 : index
      %40 = vector.load %arg3[%c0_15, %c0_16] : memref<1x1xf32, #tpu.memory_space<vmem>>, vector<1x1xf32>
      %41 = vector.shape_cast %33 : vector<1x256xf32> to vector<1x1x256xf32>
      %cst_17 = arith.constant dense<0.000000e+00> : vector<1xf32>
      %42 = vector.multi_reduction <add>, %41, %cst_17 [1, 2] : vector<1x1x256xf32> to vector<1xf32>
      %43 = vector.shape_cast %42 : vector<1xf32> to vector<1x1x1xf32>
      %44 = vector.extract %43[0, 0, 0] : f32 from vector<1x1x1xf32>
      %cst_18 = arith.constant 5.000000e-03 : f32
      %45 = arith.mulf %cst_18, %44 : f32
      %46 = vector.broadcast %45 : f32 to vector<1x1xf32>
      %47 = arith.addf %40, %46 : vector<1x1xf32>
      %c0_19 = arith.constant 0 : index
      %c0_20 = arith.constant 0 : index
      %48 = vector.load %arg3[%c0_19, %c0_20] : memref<1x1xf32, #tpu.memory_space<vmem>>, vector<1x1xf32>
      tpu.vector_store %arg3[%c0_19, %c0_20], %47 {strides = array<i32>} : memref<1x1xf32, #tpu.memory_space<vmem>>, vector<1x1xf32>,
    } else {
    }
    %c0_i32_13 = arith.constant 0 : i32
    %37 = arith.cmpi eq, %arg0, %c0_i32_13 : i32
    %38 = arith.extui %37 : i1 to i32
    %c0_i32_14 = arith.constant 0 : i32
    %39 = arith.cmpi ne, %38, %c0_i32_14 : i32
    scf.if %39 {
      %40 = tpu.iota {dimensions = array<i32: 1>} : vector<1x256xi32>
      %c256_i32 = arith.constant 256 : i32
      %41 = arith.muli %arg0, %c256_i32 : i32
      %c200_i32 = arith.constant 200 : i32
      %42 = arith.subi %c200_i32, %41 : i32
      %43 = vector.broadcast %42 : i32 to vector<1x256xi32>
      %44 = arith.cmpi slt, %40, %43 : vector<1x256xi32>
      %c0_15 = arith.constant 0 : index
      %c0_16 = arith.constant 0 : index
      %45 = vector.load %arg3[%c0_15, %c0_16] : memref<1x1xf32, #tpu.memory_space<vmem>>, vector<1x1xf32>
      %cst_17 = arith.constant 0.000000e+00 : f32
      %46 = vector.broadcast %cst_17 : f32 to vector<1x256xf32>
      %47 = arith.select %44, %33, %46 : vector<1x256xi1>, vector<1x256xf32>
      %48 = vector.shape_cast %47 : vector<1x256xf32> to vector<1x1x256xf32>
      %cst_18 = arith.constant dense<0.000000e+00> : vector<1xf32>
      %49 = vector.multi_reduction <add>, %48, %cst_18 [1, 2] : vector<1x1x256xf32> to vector<1xf32>
      %50 = vector.shape_cast %49 : vector<1xf32> to vector<1x1x1xf32>
      %51 = vector.extract %50[0, 0, 0] : f32 from vector<1x1x1xf32>
      %cst_19 = arith.constant 5.000000e-03 : f32
      %52 = arith.mulf %cst_19, %51 : f32
      %53 = vector.broadcast %52 : f32 to vector<1x1xf32>
      %54 = arith.addf %45, %53 : vector<1x1xf32>
      %c0_20 = arith.constant 0 : index
      %c0_21 = arith.constant 0 : index
      %55 = vector.load %arg3[%c0_20, %c0_21] : memref<1x1xf32, #tpu.memory_space<vmem>>, vector<1x1xf32>
      tpu.vector_store %arg3[%c0_20, %c0_21], %54 {strides = array<i32>} : memref<1x1xf32, #tpu.memory_space<vmem>>, vector<1x1xf32>,
    } else {
    }
    return
  }
  func.func @transform_0(%arg0: i32) -> (i32, i32) {
    %c0_i32 = arith.constant 0 : i32
    %c0_i32_0 = arith.constant 0 : i32
    return %c0_i32, %arg0 : i32, i32
  }
  func.func @transform_1(%arg0: i32) -> (i32, i32) {
    %c0_i32 = arith.constant 0 : i32
    %c0_i32_0 = arith.constant 0 : i32
    return %c0_i32, %arg0 : i32, i32
  }
  func.func @transform_2(%arg0: i32) -> (i32, i32) {
    %c0_i32 = arith.constant 0 : i32
    %c0_i32_0 = arith.constant 0 : i32
    %c0_i32_1 = arith.constant 0 : i32
    return %c0_i32, %c0_i32_0 : i32, i32
  }
}

</mosaic_0001>

<llo_original>
// kernel: line_loss.2
$region0: #{line_loss.2}
  #allocation0 [shape = 'u32[]', space=smem, size = 0x4, offset = 0x4, fixed_abs, tag = 'smem constant byte address 0x4 - core index']
  #allocation1 [shape = 'u32[144,128]{1,0:T(1,128)}', space=vmem, size = 0x12000, scoped, tag = 'internal scratch']
  %s0 = inlined_call_operand.vmem [shape: f32[200,6], index: 0, kind: input, shape index: {}]
  %s1 = inlined_call_operand.hbm [shape: f32[200,6], index: 1, kind: input, shape index: {}]
  %s2 = inlined_call_operand.hbm [shape: f32[1,1], index: 2, kind: output, shape index: {}]
  %s3 = sld [smem:[#allocation0]]
  $region34: #{line_loss.2} parent=0
    _
  %s5 = ssub.s32 1, %s3
  %s6 = scalar_select 0, %s5, %s3
  $region1: #{line_loss.2} parent=0
    #allocation2 [shape = 'u8[8192]{0}', space=vmem, size = 0x2000, scoped, tag = 'operand span for operand 1']
    #allocation3 [shape = 's32[1]{0}', space=sflag, size = 0x4, scoped, tag = 'scoped memory for line_loss.2']
    #allocation4 [shape = 's32[1]{0}', space=sflag, size = 0x4, scoped, tag = 'scoped memory for line_loss.2']
    #allocation5 [shape = 'u8[512]{0}', space=vmem, size = 0x400, scoped, tag = 'output window, operand 0, single buffered']
    #allocation6 [shape = 'u8[8192]{0}', space=vmem, size = 0x2000, dematerialized = true, scoped, tag = 'FusionAdapter Buffer %fusion.2 = f32[6,200]{1,0:T(8,128)} fusion(%param_1.2), kind=kLoop, calls=%fused_computation.2.clone, metadata={op_name="jit(line_loss)/transpose" stack_frame_id=7}']
    #allocation7 [shape = 'u8[8192]{0}', space=vmem, size = 0x2000, dematerialized = true, scoped, tag = 'FusionAdapter Buffer %fusion.1 = f32[6,200]{1,0:T(8,128)} fusion(%param_0.2), kind=kLoop, calls=%fused_computation.1.clone, metadata={op_name="jit(line_loss)/transpose" stack_frame_id=8}']
    %7 = vsyncpa [#allocation3], 0
    %8 = vsyncpa [#allocation4], 0
    // Predicated region
    $region2: #{line_loss.2} parent=1 // pred_check
      _
    $region3: #{line_loss.2} parent=1 // pred_check_branch
      %10 = sbr.rel (0) target = $region5
    $region4: #{line_loss.2} parent=1 // pred_region
      %s12 = ssub.s32 256, 256
      %13 = vsyncadd [#allocation3], %s12
      %s15 = sshll.u32 [#allocation2], 4
      %s16 = int_to_ptr.vmem [resolvable:$true] %s15
      %18 = dma.hbm_to_vmem [thread:$0]  %s1, 256, %s16, [#allocation3]
    $region5: #{line_loss.2} parent=1 // pred_fallthru
      _
    // Predicated region
    $region6: #{line_loss.2} parent=1 // pred_check
      _
    $region7: #{line_loss.2} parent=1 // pred_check_branch
      %20 = sbr.rel (0) target = $region9
    $region8: #{line_loss.2} parent=1 // pred_region
      _
    $region9: #{line_loss.2} parent=1 // pred_fallthru
      _
    // Predicated region
    $region10: #{line_loss.2} parent=1 // pred_check
      _
    $region11: #{line_loss.2} parent=1 // pred_check_branch
      %22 = sbr.rel (0) target = $region13
    $region12: #{line_loss.2} parent=1 // pred_region
      %23 = dma.done [#allocation3], 256
    $region13: #{line_loss.2} parent=1 // pred_fallthru
      _
    %v24 = vld [vmem:[#allocation2] sm:$0x3f]
    %26 = vst [vmem:[#allocation6] sm:$0xff] %v24
    %s27 = scalar_lea.vmem [#allocation2], 8
    %v28 = vld [vmem:[%s27] sm:$0x3f]
    %s29 = scalar_lea.vmem [#allocation6], 8
    %31 = vst [vmem:[%s29] sm:$0xff] %v28
    %v32 = vld [vmem:[%s0] sm:$0x3f]
    %34 = vst [vmem:[#allocation7] sm:$0xff] %v32
    %s35 = scalar_lea.vmem %s0, 8
    %v36 = vld [vmem:[%s35] sm:$0x3f]
    %s37 = scalar_lea.vmem [#allocation7], 8
    %39 = vst [vmem:[%s37] sm:$0xff] %v36
    %p40 = scmp.eq.s32.totalorder 0, 0
    // Predicated region
    $region14: #{line_loss.2} parent=1 // pred_check
      %p41 = pneg %p40
    $region15: #{line_loss.2} parent=1 // pred_check_branch
      %43 = sbr.rel (%p41) target = $region17
    $region16: #{line_loss.2} parent=1 // pred_region
      %vm44 = vcmask 0
      %45 = vst.msk [vmem:[#allocation5] sm:$0x1] %vm44, 0.0
    $region17: #{line_loss.2} parent=1 // pred_fallthru
      _
    %v46 = vld [vmem:[#allocation6] sm:$0x3f]
    %v47 = vld [vmem:[#allocation6 + $0x8] sm:$0x3f]
    %v48 = vld [vmem:[#allocation7] sm:$0x3f]
    %v49 = vld [vmem:[#allocation7 + $0x8] sm:$0x3f]
    %v52 = vrot.slane %v48, 4
    %v53 = vrot.slane %v49, 4
    %vm56 = vcmask 1041408
    %v57 = vsel %vm56, %v52, %v48
    %v58 = vsel %vm56, %v53, %v49
    %vm59 = vcmask 1043456
    %v60 = vsel %vm59, %v57, %v52
    %v61 = vsel %vm59, %v58, %v53
    %v62 = vsub.f32 %v46, %v48
    %v63 = vsub.f32 %v47, %v49
    %v64 = vand.u32 2147483647, %v62
    %v65 = vand.u32 2147483647, %v63
    %vm66 = vcmp.lt.f32.partialorder %v64, 1.0
    %vm67 = vcmp.lt.f32.partialorder %v65, 1.0
    %v68 = vmul.f32 %v64, 0.5
    %v69 = vmul.f32 %v65, 0.5
    %v70 = vmul.f32 %v68, %v64
    %v71 = vmul.f32 %v69, %v65
    %v72 = vsub.f32 %v64, 0.5
    %v73 = vsub.f32 %v65, 0.5
    %v74 = vsel %vm66, %v70, %v72
    %v75 = vsel %vm67, %v71, %v73
    %v76 = vsub.f32 %v46, %v60
    %v77 = vsub.f32 %v47, %v61
    %v78 = vand.u32 2147483647, %v76
    %v79 = vand.u32 2147483647, %v77
    %vm80 = vcmp.lt.f32.partialorder %v78, 1.0
    %vm81 = vcmp.lt.f32.partialorder %v79, 1.0
    %v82 = vmul.f32 %v78, 0.5
    %v83 = vmul.f32 %v79, 0.5
    %v84 = vmul.f32 %v82, %v78
    %v85 = vmul.f32 %v83, %v79
    %v86 = vsub.f32 %v78, 0.5
    %v87 = vsub.f32 %v79, 0.5
    %v88 = vsel %vm80, %v84, %v86
    %v89 = vsel %vm81, %v85, %v87
    %vm90 = vcmask 1045504
    %v91 = vsel %vm90, %v74, 0.0
    %v92 = vrot.slane %v91, 4
    %v93 = vadd.f32 %v91, %v92
    %v94 = vrot.slane %v93, 2
    %v95 = vadd.f32 %v93, %v94
    %v96 = vrot.slane %v95, 1
    %v97 = vadd.f32 %v95, %v96
    %v98 = vsel %vm90, %v75, 0.0
    %v99 = vrot.slane %v98, 4
    %v100 = vadd.f32 %v98, %v99
    %v101 = vrot.slane %v100, 2
    %v102 = vadd.f32 %v100, %v101
    %v103 = vrot.slane %v102, 1
    %v104 = vadd.f32 %v102, %v103
    %v105 = vsel %vm90, %v88, 0.0
    %v106 = vrot.slane %v105, 4
    %v107 = vadd.f32 %v105, %v106
    %v108 = vrot.slane %v107, 2
    %v109 = vadd.f32 %v107, %v108
    %v110 = vrot.slane %v109, 1
    %v111 = vadd.f32 %v109, %v110
    %v112 = vsel %vm90, %v89, 0.0
    %v113 = vrot.slane %v112, 4
    %v114 = vadd.f32 %v112, %v113
    %v115 = vrot.slane %v114, 2
    %v116 = vadd.f32 %v114, %v115
    %v117 = vrot.slane %v116, 1
    %v118 = vadd.f32 %v116, %v117
    %v119 = vmin.f32 %v97, %v111
    %v120 = vmin.f32 %v104, %v118
    %p121 = scmp.ne.s32.totalorder 0, 0
    // Predicated region
    $region18: #{line_loss.2} parent=1 // pred_check
      %p122 = pneg %p121
    $region19: #{line_loss.2} parent=1 // pred_check_branch
      %124 = sbr.rel (%p122) target = $region21
    $region20: #{line_loss.2} parent=1 // pred_region
      %v125 = vld [vmem:[#allocation5] sm:$0x1]
      %vm126 = vcmask 1040384
      %v127 = vsel %vm126, %v119, 0.0
      %v128 = vsel %vm126, %v120, 0.0
      %v129 = vadd.f32 %v127, %v128
      %130 = vadd.xlane.f32.xlu0 %v129
      %v131 = vpop.xlane.xlu0 %130
      %v132 = vrot.slane %v131, 4
      %v133 = vadd.f32 %v131, %v132
      %v134 = vrot.slane %v133, 2
      %v135 = vadd.f32 %v133, %v134
      %v136 = vrot.slane %v135, 1
      %v137 = vadd.f32 %v135, %v136
      %s138 = vtos %v137
      %s139 = smul.f32 %s138, 0.005
      %v140 = vstv %s139
      %v141 = vadd.f32 %v125, %v140
      %vm142 = vcmask 0
      %143 = vst.msk [vmem:[#allocation5] sm:$0x1] %vm142, %v141
    $region21: #{line_loss.2} parent=1 // pred_fallthru
      _
    // Predicated region
    $region22: #{line_loss.2} parent=1 // pred_check
      %p144 = pneg %p40
    $region23: #{line_loss.2} parent=1 // pred_check_branch
      %146 = sbr.rel (%p144) target = $region25
    $region24: #{line_loss.2} parent=1 // pred_region
      %v147 = vlaneseq
      %v148 = vand.u32 %v147, 127
      %v149 = vadd.s32 %v148, 128
      %s150 = smul.u32 0, 256
      %s151 = ssub.s32 200, %s150
      %v152 = vstv %s151
      %vm153 = vcmp.lt.s32.totalorder %v148, %v152
      %vm154 = vcmp.lt.s32.totalorder %v149, %v152
      %v155 = vld [vmem:[#allocation5] sm:$0x1]
      %v156 = vsel %vm153, %v119, 0.0
      %v157 = vsel %vm154, %v120, 0.0
      %vm158 = vcmask 1040384
      %v159 = vsel %vm158, %v156, 0.0
      %v160 = vsel %vm158, %v157, 0.0
      %v161 = vadd.f32 %v159, %v160
      %162 = vadd.xlane.f32.xlu0 %v161
      %v163 = vpop.xlane.xlu0 %162
      %v164 = vrot.slane %v163, 4
      %v165 = vadd.f32 %v163, %v164
      %v166 = vrot.slane %v165, 2
      %v167 = vadd.f32 %v165, %v166
      %v168 = vrot.slane %v167, 1
      %v169 = vadd.f32 %v167, %v168
      %s170 = vtos %v169
      %s171 = smul.f32 %s170, 0.005
      %v172 = vstv %s171
      %v173 = vadd.f32 %v155, %v172
      %vm174 = vcmask 0
      %175 = vst.msk [vmem:[#allocation5] sm:$0x1] %vm174, %v173
    $region25: #{line_loss.2} parent=1 // pred_fallthru
      _
    // Predicated region
    $region26: #{line_loss.2} parent=1 // pred_check
      _
    $region27: #{line_loss.2} parent=1 // pred_check_branch
      %177 = sbr.rel (0) target = $region29
    $region28: #{line_loss.2} parent=1 // pred_region
      %s179 = ssub.s32 16, 16
      %180 = vsyncadd [#allocation4], %s179
      %s182 = sshll.u32 [#allocation5], 4
      %s183 = int_to_ptr.vmem [resolvable:$true] %s182
      %185 = dma.vmem_to_hbm [thread:$0]  %s183, 16, %s2, [#allocation4]
    $region29: #{line_loss.2} parent=1 // pred_fallthru
      _
    // Predicated region
    $region30: #{line_loss.2} parent=1 // pred_check
      _
    $region31: #{line_loss.2} parent=1 // pred_check_branch
      %187 = sbr.rel (0) target = $region33
    $region32: #{line_loss.2} parent=1 // pred_region
      %188 = dma.done [#allocation4], 16
    $region33: #{line_loss.2} parent=1 // pred_fallthru
      _
    %189 = vsyncpa [#allocation3], 1
    %190 = vsyncpa [#allocation4], 1

</llo_original>
